<compile_context>
chip_gen: v7x
topology: tpu7x:2x2x1
jax: 0.10.0
libtpu: 0.0.40
codegen_flags: <defaults>
</compile_context>

<pallas_src>
import math

import jax
import jax.numpy as jnp
from jax.experimental import pallas as pl
from jax.experimental.pallas import tpu as pltpu

# Keep actual VMEM usage well under the scoped limit on every generation
# (v5e default 16 MiB scoped, v7x 64 MiB physical). Budget already counts
# double-buffering of input + output blocks.
_VMEM_TILE_BUDGET_BYTES = 16 * 1024 * 1024
_VMEM_LIMIT_BYTES = 32 * 1024 * 1024


def _cls_token_kernel(w_ref, emb_ref, out_emb_ref):
    """Write the CLS row and bulk-copy the embedding block.

    w_ref:       (1, D)       -- CLS token row, already in embedding dtype
    emb_ref:     (G, S, D)    -- a group of G batch elements
    out_emb_ref: (G, S+1, D)
    """
    G, S, D = emb_ref.shape
    # Row 0 of every batch element in the group gets the CLS token.
    out_emb_ref[:, 0:1, :] = jnp.broadcast_to(w_ref[...][:, None, :], (G, 1, D))
    # Rows 1..S are a straight copy of the input embedding (no temporaries).
    out_emb_ref[:, pl.ds(1, S), :] = emb_ref[...]


def _choose_group_size(B, S, D, itemsize, budget_bytes=_VMEM_TILE_BUDGET_BYTES):
    """Largest per-step batch group whose double-buffered tiles fit the budget."""
    # 2x for double-buffering; input block (S, D) + output block (S+1, D).
    per_elem = 2 * (S * D + (S + 1) * D) * itemsize
    g = max(1, budget_bytes // max(per_elem, 1))
    return int(min(B, g))


def cm2_cls_token_forward(weight, embedding, attention_mask=None):
    """JAX/Pallas equivalent of CM2CLSToken.forward.

    weight:         [D]
    embedding:      [B, S, D]
    attention_mask: [B, S] or None
    returns dict with 'embedding' [B, S+1, D] and 'attention_mask' ([B, S+1] or None)
    """
    B, S, D = embedding.shape
    # Cast once in the wrapper (matches previous behavior: embedding dtype wins).
    w2d = weight.reshape(1, D).astype(embedding.dtype)

    itemsize = jnp.dtype(embedding.dtype).itemsize
    G = _choose_group_size(B, S, D, itemsize)
    grid = (pl.cdiv(B, G),)

    out_emb = pl.pallas_call(
        _cls_token_kernel,
        out_shape=jax.ShapeDtypeStruct((B, S + 1, D), embedding.dtype),
        grid_spec=pltpu.PrefetchScalarGridSpec(
            num_scalar_prefetch=0,
            grid=grid,
            in_specs=[
                pl.BlockSpec((1, D), lambda b: (0, 0)),
                pl.BlockSpec((G, S, D), lambda b: (b, 0, 0)),
            ],
            out_specs=pl.BlockSpec((G, S + 1, D), lambda b: (b, 0, 0)),
        ),
        compiler_params=pltpu.CompilerParams(
            dimension_semantics=("parallel",),
            vmem_limit_bytes=_VMEM_LIMIT_BYTES,
        ),
    )(w2d, embedding)

    out_mask = None
    if attention_mask is not None:
        # Tiny [B, S+1] concat: cheaper as plain XLA than as an extra ragged
        # masked-store DMA stream inside the Pallas kernel.
        out_mask = jnp.concatenate(
            [jnp.ones((B, 1), dtype=attention_mask.dtype), attention_mask],
            axis=1,
        )

    return {"embedding": out_emb, "attention_mask": out_mask}


if __name__ == "__main__":
    B, S, D = 2, 8, 32

    key = jax.random.PRNGKey(0)
    k_w, k_e, k_m = jax.random.split(key, 3)

    # Deterministic parameter init mirroring nn_init.uniform_(-1/sqrt(D), 1/sqrt(D)).
    bound = 1.0 / math.sqrt(D)
    weight = jax.random.uniform(k_w, (D,), dtype=jnp.float32,
                                minval=-bound, maxval=bound)

    embedding = jax.random.normal(k_e, (B, S, D), dtype=jnp.float32)
    attention_mask = (jax.random.uniform(k_m, (B, S)) > 0.3).astype(jnp.float32)

    out = cm2_cls_token_forward(weight, embedding, attention_mask)
    out_emb = jax.block_until_ready(out["embedding"])
    out_mask = jax.block_until_ready(out["attention_mask"])

    # Reference check in plain JAX.
    ref_emb = jnp.concatenate(
        [jnp.broadcast_to(weight.reshape(1, 1, D), (B, 1, D)), embedding], axis=1)
    ref_mask = jnp.concatenate(
        [jnp.ones((B, 1), dtype=attention_mask.dtype), attention_mask], axis=1)

    assert out_emb.shape == (B, S + 1, D)
    assert out_mask.shape == (B, S + 1)
    assert jnp.allclose(out_emb, ref_emb)
    assert jnp.allclose(out_mask, ref_mask)

    # Also exercise the attention_mask=None path.
    out2 = cm2_cls_token_forward(weight, embedding, None)
    out2_emb = jax.block_until_ready(out2["embedding"])
    assert out2["attention_mask"] is None
    assert jnp.allclose(out2_emb, ref_emb)

    print("KERNEL_OK")
</pallas_src>

<mosaic_0001>
module attributes {stable_mosaic.version = 11 : i64} {
  func.func @_cls_token_kernel(%arg0: i32, %arg1: memref<1x32xf32, #tpu.memory_space<vmem>>, %arg2: memref<2x8x32xf32, #tpu.memory_space<vmem>>, %arg3: memref<2x9x32xf32, #tpu.memory_space<vmem>>) attributes {dimension_semantics = [#tpu.dimension_semantics<parallel>], iteration_bounds = array<i64: 1>, scalar_prefetch = 0 : i64, scratch_operands = 0 : i64, tpu.core_type = #tpu.core_type<tc>, window_params = [{pipeline_mode = #tpu.pipeline_mode<synchronous>, transform_indices = @transform_0, window_bounds = array<i64: 1, 32>}, {transform_indices = @transform_1, window_bounds = array<i64: 2, 8, 32>}, {transform_indices = @transform_2, window_bounds = array<i64: 2, 9, 32>}]} {
    %c0 = arith.constant 0 : index
    %c0_0 = arith.constant 0 : index
    %0 = vector.load %arg1[%c0, %c0_0] : memref<1x32xf32, #tpu.memory_space<vmem>>, vector<1x32xf32>
    %1 = vector.shape_cast %0 : vector<1x32xf32> to vector<1x1x32xf32>
    %2 = vector.shape_cast %1 : vector<1x1x32xf32> to vector<1x1x32xf32>
    %3 = vector.broadcast %2 : vector<1x1x32xf32> to vector<2x1x32xf32>
    %c0_1 = arith.constant 0 : index
    %c0_2 = arith.constant 0 : index
    %c0_3 = arith.constant 0 : index
    %4 = vector.load %arg3[%c0_1, %c0_2, %c0_3] : memref<2x9x32xf32, #tpu.memory_space<vmem>>, vector<2x1x32xf32>
    tpu.vector_store %arg3[%c0_1, %c0_2, %c0_3], %3 {strides = array<i32>} : memref<2x9x32xf32, #tpu.memory_space<vmem>>, vector<2x1x32xf32>,
    %c0_4 = arith.constant 0 : index
    %c0_5 = arith.constant 0 : index
    %c0_6 = arith.constant 0 : index
    %5 = vector.load %arg2[%c0_4, %c0_5, %c0_6] : memref<2x8x32xf32, #tpu.memory_space<vmem>>, vector<2x8x32xf32>
    %c0_7 = arith.constant 0 : index
    %c1 = arith.constant 1 : index
    %c0_8 = arith.constant 0 : index
    %6 = vector.load %arg3[%c0_7, %c1, %c0_8] : memref<2x9x32xf32, #tpu.memory_space<vmem>>, vector<2x8x32xf32>
    tpu.vector_store %arg3[%c0_7, %c1, %c0_8], %5 {strides = array<i32>} : memref<2x9x32xf32, #tpu.memory_space<vmem>>, vector<2x8x32xf32>,
    return
  }
  func.func @transform_0(%arg0: i32) -> (i32, i32) {
    %c0_i32 = arith.constant 0 : i32
    %c0_i32_0 = arith.constant 0 : i32
    %c0_i32_1 = arith.constant 0 : i32
    return %c0_i32, %c0_i32_0 : i32, i32
  }
  func.func @transform_1(%arg0: i32) -> (i32, i32, i32) {
    %c0_i32 = arith.constant 0 : i32
    %c0_i32_0 = arith.constant 0 : i32
    %c0_i32_1 = arith.constant 0 : i32
    return %arg0, %c0_i32, %c0_i32_0 : i32, i32, i32
  }
  func.func @transform_2(%arg0: i32) -> (i32, i32, i32) {
    %c0_i32 = arith.constant 0 : i32
    %c0_i32_0 = arith.constant 0 : i32
    %c0_i32_1 = arith.constant 0 : i32
    return %arg0, %c0_i32, %c0_i32_0 : i32, i32, i32
  }
}

</mosaic_0001>

<llo_original>
// kernel: tpu_custom_call.1
$region0: #{tpu_custom_call.1}
  #allocation0 [shape = 'u32[]', space=smem, size = 0x4, offset = 0x4, fixed_abs, tag = 'smem constant byte address 0x4 - core index']
  #allocation1 [shape = 'u32[144,128]{1,0:T(1,128)}', space=vmem, size = 0x12000, scoped, tag = 'internal scratch']
  %s0 = inlined_call_operand.hbm [shape: f32[1,32], index: 0, kind: input, shape index: {}]
  %s1 = inlined_call_operand.hbm [shape: f32[2,8,32], index: 1, kind: input, shape index: {}]
  %s2 = inlined_call_operand.vmem [shape: f32[2,9,32], index: 2, kind: output, shape index: {}]
  %s3 = sld [smem:[#allocation0]]
  $region26: #{tpu_custom_call.1} parent=0
    _
  %s5 = ssub.s32 1, %s3
  %s6 = scalar_select 0, %s5, %s3
  $region1: #{tpu_custom_call.1} parent=0
    #allocation2 [shape = 'u8[512]{0}', space=vmem, size = 0x400, scoped, tag = 'input window, operand 0, single buffered']
    #allocation3 [shape = 's32[1]{0}', space=sflag, size = 0x4, scoped, tag = 'scoped memory for tpu_custom_call.1']
    #allocation4 [shape = 'u8[8192]{0}', space=vmem, size = 0x2000, scoped, tag = 'input window, operand 1, single buffered']
    #allocation5 [shape = 's32[1]{0}', space=sflag, size = 0x4, scoped, tag = 'scoped memory for tpu_custom_call.1']
    %7 = vsyncpa [#allocation3], 0
    %8 = vsyncpa [#allocation5], 0
    // Predicated region
    $region2: #{tpu_custom_call.1} parent=1 // pred_check
      _
    $region3: #{tpu_custom_call.1} parent=1 // pred_check_branch
      %10 = sbr.rel (0) target = $region5
    $region4: #{tpu_custom_call.1} parent=1 // pred_region
      %s12 = ssub.s32 16, 16
      %13 = vsyncadd [#allocation3], %s12
      %s15 = sshll.u32 [#allocation2], 4
      %s16 = int_to_ptr.vmem [resolvable:$true] %s15
      %18 = dma.hbm_to_vmem [thread:$0]  %s0, 16, %s16, [#allocation3]
    $region5: #{tpu_custom_call.1} parent=1 // pred_fallthru
      _
    // Predicated region
    $region6: #{tpu_custom_call.1} parent=1 // pred_check
      _
    $region7: #{tpu_custom_call.1} parent=1 // pred_check_branch
      %20 = sbr.rel (0) target = $region9
    $region8: #{tpu_custom_call.1} parent=1 // pred_region
      %s22 = ssub.s32 256, 256
      %23 = vsyncadd [#allocation5], %s22
      %s24 = sshll.u32 [#allocation4], 4
      %s25 = int_to_ptr.vmem [resolvable:$true] %s24
      %30 = dma.hbm_to_vmem [thread:$0]  %s1, 256, %s25, [#allocation5], 128, 128, 8
    $region9: #{tpu_custom_call.1} parent=1 // pred_fallthru
      _
    // Predicated region
    $region10: #{tpu_custom_call.1} parent=1 // pred_check
      _
    $region11: #{tpu_custom_call.1} parent=1 // pred_check_branch
      %32 = sbr.rel (0) target = $region13
    $region12: #{tpu_custom_call.1} parent=1 // pred_region
      %33 = dma.done [#allocation3], 16
    $region13: #{tpu_custom_call.1} parent=1 // pred_fallthru
      _
    // Predicated region
    $region14: #{tpu_custom_call.1} parent=1 // pred_check
      _
    $region15: #{tpu_custom_call.1} parent=1 // pred_check_branch
      %35 = sbr.rel (0) target = $region17
    $region16: #{tpu_custom_call.1} parent=1 // pred_region
      %36 = dma.done [#allocation5], 256
    $region17: #{tpu_custom_call.1} parent=1 // pred_fallthru
      _
    %v37 = vld [vmem:[#allocation2] sm:$0x1]
    %vm38 = vcmask 253952
    %39 = vst.msk [vmem:[%s2] sm:$0x1] %vm38, %v37
    %40 = vst.msk [vmem:[%s2 + $0x10] sm:$0x1] %vm38, %v37
    %v41 = vld [vmem:[#allocation4] sm:$0xff]
    %v42 = vld [vmem:[#allocation4 + $0x8] sm:$0xff]
    %vm43 = vcmask 261120
    %44 = vst.msk [vmem:[%s2 + $0x1] sm:$0xff] %vm43, %v41
    %45 = vst.msk [vmem:[%s2 + $0x11] sm:$0xff] %vm43, %v42
    // Predicated region
    $region18: #{tpu_custom_call.1} parent=1 // pred_check
      _
    $region19: #{tpu_custom_call.1} parent=1 // pred_check_branch
      %47 = sbr.rel (0) target = $region21
    $region20: #{tpu_custom_call.1} parent=1 // pred_region
      _
    $region21: #{tpu_custom_call.1} parent=1 // pred_fallthru
      _
    // Predicated region
    $region22: #{tpu_custom_call.1} parent=1 // pred_check
      _
    $region23: #{tpu_custom_call.1} parent=1 // pred_check_branch
      %49 = sbr.rel (0) target = $region25
    $region24: #{tpu_custom_call.1} parent=1 // pred_region
      _
    $region25: #{tpu_custom_call.1} parent=1 // pred_fallthru
      _
    %50 = vsyncpa [#allocation3], 1
    %51 = vsyncpa [#allocation5], 1

</llo_original>
